<compile_context>
chip_gen: v7x
topology: tpu7x:2x2x1
jax: 0.10.0
libtpu: 0.0.40
codegen_flags: <defaults>
</compile_context>

<pallas_src>
import functools

import jax
import jax.numpy as jnp
from jax.experimental import pallas as pl
from jax.experimental.pallas import tpu as pltpu

LANE = 128


def _round_up(x, m):
    return ((x + m - 1) // m) * m


def pointer_net_kernel(x_ref, w_ref, b_ref, o_ref):
    # x_ref: (TB, D_pad)  activation tile (gen_input, zero-padded lanes)
    # w_ref: (1,  D_pad)  Linear weight row (zero-padded lanes)
    # b_ref: (1,)         bias scalar in SMEM
    x = x_ref[...]
    w = w_ref[...]                                   # broadcast over batch rows
    acc = jnp.sum(x * w, axis=-1, keepdims=True)     # VPU mul + XLU lane reduce
    acc = acc + b_ref[0]
    o_ref[...] = jax.nn.sigmoid(acc).astype(o_ref.dtype)
    # NOTE: for very large B a lane-dense (1, TB) output layout would avoid the
    # masked width-1 stores; at decode-sized batches the (TB, 1) store is fine.


def prepare_pointer_net_weight(weight):
    """One-time weight prep (weights are constant across decode steps).

    weight: (1, D) PyTorch nn.Linear layout.  The Linear consumes
    cat([input_emb, context, rnn_output], 1) and the kernel builds its
    activation slab in the same order, so the row is already laid out
    correctly -- just zero-pad it to a lane-dense multiple of 128.
    """
    d = weight.shape[1]
    d_pad = _round_up(d, LANE)
    return jnp.pad(weight.astype(jnp.float32), ((0, 0), (0, d_pad - d)))


@functools.partial(jax.jit, static_argnames=("max_tile_b",))
def pointer_net_forward(context, rnn_output, input_emb, w_row, bias,
                        max_tile_b=512):
    """context: (B,1,H), rnn_output: (B,1,H), input_emb: (B,E),
    w_row: (1, D_pad) from prepare_pointer_net_weight, bias: (1,)."""
    ctx = jnp.squeeze(context, axis=1)           # (B, H)
    rnn = jnp.squeeze(rnn_output, axis=1)        # (B, H)
    b, e = input_emb.shape
    d = e + ctx.shape[1] + rnn.shape[1]
    d_pad = w_row.shape[1]

    # Single lane-contiguous activation slab (B, D_pad).
    x = jnp.concatenate([input_emb, ctx, rnn], axis=1).astype(jnp.float32)
    if d_pad > d:
        x = jnp.pad(x, ((0, 0), (0, d_pad - d)))

    # Batch tiling (sublane-aligned).  At small B this collapses to a single
    # grid step; at large B it gives pipelining + parallel-axis core sharding.
    tb = min(max_tile_b, _round_up(b, 8))
    b_pad = _round_up(b, tb)
    if b_pad > b:
        x = jnp.pad(x, ((0, b_pad - b), (0, 0)))

    out = pl.pallas_call(
        pointer_net_kernel,
        out_shape=jax.ShapeDtypeStruct((b_pad, 1), jnp.float32),
        grid_spec=pltpu.PrefetchScalarGridSpec(
            num_scalar_prefetch=0,
            grid=(b_pad // tb,),
            in_specs=[
                pl.BlockSpec((tb, d_pad), lambda i: (i, 0)),        # activations
                pl.BlockSpec((1, d_pad), lambda i: (0, 0)),         # weight row
                pl.BlockSpec(memory_space=pltpu.MemorySpace.SMEM),  # bias
            ],
            out_specs=pl.BlockSpec((tb, 1), lambda i: (i, 0)),
        ),
        compiler_params=pltpu.CompilerParams(
            dimension_semantics=("parallel",),       # megacore / 2-TC sharding
            vmem_limit_bytes=32 * 1024 * 1024,       # safe on v7x's 64 MiB VMEM
        ),
    )(x, w_row, bias.astype(jnp.float32))
    return out[:b]


if __name__ == "__main__":
    # args.emb_size=32, args.hidden_size=32, args.use_bidir=False -> D = 96.
    B, E, H = 8, 32, 32
    D = E + 2 * H

    key = jax.random.PRNGKey(0)
    k_ctx, k_rnn, k_emb, k_w, k_b = jax.random.split(key, 5)

    context = jax.random.normal(k_ctx, (B, 1, H), dtype=jnp.float32)
    rnn_output = jax.random.normal(k_rnn, (B, 1, H), dtype=jnp.float32)
    input_emb = jax.random.normal(k_emb, (B, E), dtype=jnp.float32)

    # Deterministic init mimicking nn.Linear: uniform(-1/sqrt(D), 1/sqrt(D)).
    bound = 1.0 / jnp.sqrt(jnp.float32(D))
    weight = jax.random.uniform(k_w, (1, D), minval=-bound, maxval=bound,
                                dtype=jnp.float32)
    bias = jax.random.uniform(k_b, (1,), minval=-bound, maxval=bound,
                              dtype=jnp.float32)

    # One-time weight prep (constant across all decode steps).
    w_row = prepare_pointer_net_weight(weight)

    out = pointer_net_forward(context, rnn_output, input_emb, w_row, bias)
    out = jax.block_until_ready(out)

    # Pure-JAX reference of the exact PyTorch forward.
    gen_input = jnp.concatenate(
        [input_emb, jnp.squeeze(context, 1), jnp.squeeze(rnn_output, 1)],
        axis=1)
    ref = jax.nn.sigmoid(gen_input @ weight.T + bias)

    assert out.shape == (B, 1), out.shape
    assert jnp.allclose(out, ref, atol=1e-5, rtol=1e-5), (out, ref)
    print("KERNEL_OK")
</pallas_src>

<mosaic_0001>
module attributes {stable_mosaic.version = 11 : i64} {
  func.func @pointer_net_kernel(%arg0: i32, %arg1: memref<8x128xf32, #tpu.memory_space<vmem>>, %arg2: memref<1x128xf32, #tpu.memory_space<vmem>>, %arg3: memref<1xf32, #tpu.memory_space<smem>>, %arg4: memref<8x1xf32, #tpu.memory_space<vmem>>) attributes {dimension_semantics = [#tpu.dimension_semantics<parallel>], iteration_bounds = array<i64: 1>, scalar_prefetch = 0 : i64, scratch_operands = 0 : i64, tpu.core_type = #tpu.core_type<tc>, window_params = [{transform_indices = @transform_0, window_bounds = array<i64: 8, 128>}, {pipeline_mode = #tpu.pipeline_mode<synchronous>, transform_indices = @transform_1, window_bounds = array<i64: 1, 128>}, {transform_indices = @transform_2, window_bounds = array<i64: 1>}, {transform_indices = @transform_3, window_bounds = array<i64: 8, 1>}]} {
    %c0 = arith.constant 0 : index
    %c0_0 = arith.constant 0 : index
    %0 = vector.load %arg1[%c0, %c0_0] : memref<8x128xf32, #tpu.memory_space<vmem>>, vector<8x128xf32>
    %c0_1 = arith.constant 0 : index
    %c0_2 = arith.constant 0 : index
    %1 = vector.load %arg2[%c0_1, %c0_2] : memref<1x128xf32, #tpu.memory_space<vmem>>, vector<1x128xf32>
    %2 = vector.broadcast %1 : vector<1x128xf32> to vector<8x128xf32>
    %3 = arith.mulf %0, %2 : vector<8x128xf32>
    %cst = arith.constant dense<0.000000e+00> : vector<8xf32>
    %4 = vector.multi_reduction <add>, %3, %cst [1] : vector<8x128xf32> to vector<8xf32>
    %5 = vector.shape_cast %4 : vector<8xf32> to vector<8x1xf32>
    %c0_3 = arith.constant 0 : index
    %6 = memref.load %arg3[%c0_3] : memref<1xf32, #tpu.memory_space<smem>>
    %7 = vector.broadcast %6 : f32 to vector<8x1xf32>
    %8 = arith.addf %5, %7 : vector<8x1xf32>
    %9 = arith.negf %8 : vector<8x1xf32>
    %10 = math.exp %9 : vector<8x1xf32>
    %cst_4 = arith.constant 1.000000e+00 : f32
    %11 = vector.broadcast %cst_4 : f32 to vector<8x1xf32>
    %12 = arith.addf %11, %10 : vector<8x1xf32>
    %13 = arith.divf %11, %12 : vector<8x1xf32>
    %c0_5 = arith.constant 0 : index
    %c0_6 = arith.constant 0 : index
    %14 = vector.load %arg4[%c0_5, %c0_6] : memref<8x1xf32, #tpu.memory_space<vmem>>, vector<8x1xf32>
    tpu.vector_store %arg4[%c0_5, %c0_6], %13 {strides = array<i32>} : memref<8x1xf32, #tpu.memory_space<vmem>>, vector<8x1xf32>,
    return
  }
  func.func @transform_0(%arg0: i32) -> (i32, i32) {
    %c0_i32 = arith.constant 0 : i32
    %c0_i32_0 = arith.constant 0 : i32
    return %arg0, %c0_i32 : i32, i32
  }
  func.func @transform_1(%arg0: i32) -> (i32, i32) {
    %c0_i32 = arith.constant 0 : i32
    %c0_i32_0 = arith.constant 0 : i32
    %c0_i32_1 = arith.constant 0 : i32
    return %c0_i32, %c0_i32_0 : i32, i32
  }
  func.func @transform_2(%arg0: i32) -> i32 {
    %c0_i32 = arith.constant 0 : i32
    %c0_i32_0 = arith.constant 0 : i32
    return %c0_i32 : i32
  }
  func.func @transform_3(%arg0: i32) -> (i32, i32) {
    %c0_i32 = arith.constant 0 : i32
    %c0_i32_0 = arith.constant 0 : i32
    return %arg0, %c0_i32 : i32, i32
  }
}

</mosaic_0001>

<llo_original>
// kernel: pointer_net_forward.1
$region0: #{pointer_net_forward.1}
  #allocation0 [shape = 'u32[]', space=smem, size = 0x4, offset = 0x4, fixed_abs, tag = 'smem constant byte address 0x4 - core index']
  #allocation1 [shape = 'u32[144,128]{1,0:T(1,128)}', space=vmem, size = 0x12000, scoped, tag = 'internal scratch']
  #allocation2 [shape = 'f32[1]{0:T(128)S(6)}', space=smem, size = 0x200, scoped, tag = 'scoped memory for pointer_net_forward.1']
  %s0 = inlined_call_operand.vmem [shape: f32[8,128], index: 0, kind: input, shape index: {}]
  %s1 = inlined_call_operand.vmem [shape: f32[1,128], index: 1, kind: input, shape index: {}]
  %s2 = inlined_call_operand.<no memory space> [shape: f32[1], index: 2, kind: input, shape index: {}]
  %s3 = inlined_call_operand.vmem [shape: f32[8,1], index: 3, kind: output, shape index: {}]
  %s4 = sld [smem:[#allocation0]]
  $region22: #{pointer_net_forward.1} parent=0
    _
  %s6 = ssub.s32 1, %s4
  %s7 = scalar_select 0, %s6, %s4
  %8 = sst [smem:[#allocation2]] %s2
  // Predicated region
  $region2: #{pointer_net_forward.1} parent=0 // pred_check
    _
  $region3: #{pointer_net_forward.1} parent=0 // pred_check_branch
    %10 = sbr.rel (0) target = $region5
  $region4: #{pointer_net_forward.1} parent=0 // pred_region
    _
  $region5: #{pointer_net_forward.1} parent=0 // pred_fallthru
    _
  // Predicated region
  $region6: #{pointer_net_forward.1} parent=0 // pred_check
    _
  $region7: #{pointer_net_forward.1} parent=0 // pred_check_branch
    %12 = sbr.rel (0) target = $region9
  $region8: #{pointer_net_forward.1} parent=0 // pred_region
    _
  $region9: #{pointer_net_forward.1} parent=0 // pred_fallthru
    _
  // Predicated region
  $region10: #{pointer_net_forward.1} parent=0 // pred_check
    _
  $region11: #{pointer_net_forward.1} parent=0 // pred_check_branch
    %14 = sbr.rel (0) target = $region13
  $region12: #{pointer_net_forward.1} parent=0 // pred_region
    _
  $region13: #{pointer_net_forward.1} parent=0 // pred_fallthru
    _
  %v15 = vld [vmem:[%s0] sm:$0xff]
  %v16 = vld [vmem:[%s1] sm:$0x1]
  %v18 = vlaneseq
  %v19 = vshrl.u32 %v18, 7
  %v20 = vsub.s32 0, %v19
  %v21 = vrot.slane %v16, %v20
  %v23 = vmul.f32 %v15, %v21
  %24 = vadd.xlane.f32.xlu0 %v23
  %v25 = vpop.xlane.xlu0 %24
  %s26 = sld [smem:[#allocation2]]
  %v27 = vstv %s26
  %v28 = vadd.f32 %v25, %v27
  %v29 = vxor.u32 %v28, 2147483648
  %v30 = vmul.f32 %v29, 1.442695
  %v31 = vpow.pop %v30
  %v32 = vadd.f32 %v31, 1.0
  %v33 = vrcp.pop %v32
  %v34 = vmul.f32 1.0, %v33
  %vm35 = vcmask 7168
  %36 = vst.msk [vmem:[%s3] sm:$0xff] %vm35, %v34
  // Predicated region
  $region14: #{pointer_net_forward.1} parent=0 // pred_check
    _
  $region15: #{pointer_net_forward.1} parent=0 // pred_check_branch
    %38 = sbr.rel (0) target = $region17
  $region16: #{pointer_net_forward.1} parent=0 // pred_region
    _
  $region17: #{pointer_net_forward.1} parent=0 // pred_fallthru
    _
  // Predicated region
  $region18: #{pointer_net_forward.1} parent=0 // pred_check
    _
  $region19: #{pointer_net_forward.1} parent=0 // pred_check_branch
    %40 = sbr.rel (0) target = $region21
  $region20: #{pointer_net_forward.1} parent=0 // pred_region
    _
  $region21: #{pointer_net_forward.1} parent=0 // pred_fallthru
    _

</llo_original>
